<compile_context>
chip_gen: v7x
topology: tpu7x:2x2x1
jax: 0.10.0
libtpu: 0.0.40
codegen_flags: <defaults>
</compile_context>

<pallas_src>
import functools
import math

import jax
import jax.numpy as jnp
from jax.experimental import pallas as pl
from jax.experimental.pallas import tpu as pltpu

SQRT_HALF = math.sqrt(0.5)


def _round_up(n, m):
    return ((n + m - 1) // m) * m


def _glu(h, w_ref, split, use_roll):
    """One GLULayer: (h @ Wa) * sigmoid(h @ Wb), Wa|Wb fused along lanes of w_ref."""
    z = jnp.dot(h.astype(jnp.bfloat16), w_ref[...],
                preferred_element_type=jnp.float32)          # f32 accumulation
    if use_roll:
        # value in lanes [0, split), gate in lanes [split, 2*split) with
        # 2*split == 128.  XLU lane-roll realigns the gate under the value.
        # Upper lanes of the result hold finite garbage that is killed by the
        # zero K-rows of the next layer's weight and is never stored.
        gate = pltpu.roll(z, shift=split, axis=1)
        return z * jax.nn.sigmoid(gate)
    a = z[:, :split]                                          # lane-tile-aligned split
    b = z[:, split:]
    return a * jax.nn.sigmoid(b)


def _feature_transformer_kernel(x_ref, w0_ref, w1_ref, w2_ref, w3_ref, o_ref,
                                *, split, use_roll, out_channels):
    x = x_ref[...]                                            # native dtype (f32 or bf16)

    # ---- shared GLUBlock (no_first_residual=True) ----
    h = _glu(x, w0_ref, split, use_roll)                      # layer 0: no residual
    h = h * SQRT_HALF + _glu(h, w1_ref, split, use_roll)      # layer 1: residual

    # ---- dependent GLUBlock (no_first_residual=False) ----
    h = h * SQRT_HALF + _glu(h, w2_ref, split, use_roll)      # layer 0: residual
    h = h * SQRT_HALF + _glu(h, w3_ref, split, use_roll)      # layer 1: residual

    # True-width store (masked vst when out_channels < 128); padded/garbage
    # lanes are never written to HBM.
    o_ref[...] = h[:, :out_channels].astype(o_ref.dtype)


def feature_transformer(x, weights, tb_max=2048):
    """Pallas forward.

    x: [batch, in_channels] (float32 or bfloat16).
    weights: 4 arrays shaped [K, 2*out_channels] (PyTorch Linear weight.T):
      [shared layer0 (K=in_channels), shared layer1, dependent layer0,
       dependent layer1] (K=out_channels for the last three).
    Returns [batch, out_channels] float32.
    """
    batch, in_channels = x.shape
    out_channels = weights[0].shape[1] // 2

    # ---- fused value|gate weight layout ----
    use_roll = out_channels <= 64
    split = 64 if use_roll else _round_up(out_channels, 128)
    # Width of the activation fed to layers 1..3:
    #   roll path keeps the full 128-lane vreg (upper lanes unused garbage/zeros),
    #   classic path keeps only the value half.
    act_width = 2 * split if use_roll else split

    def fuse_pad(w, k_pad):
        k = w.shape[0]
        wa = jnp.pad(w[:, :out_channels],
                     ((0, k_pad - k), (0, split - out_channels)))
        wb = jnp.pad(w[:, out_channels:],
                     ((0, k_pad - k), (0, split - out_channels)))
        return jnp.concatenate([wa, wb], axis=1).astype(jnp.bfloat16)  # [k_pad, 2*split]

    w0 = fuse_pad(weights[0], in_channels)   # [in_channels, 2*split]
    w1 = fuse_pad(weights[1], act_width)     # [act_width,  2*split] (extra K rows are zero)
    w2 = fuse_pad(weights[2], act_width)
    w3 = fuse_pad(weights[3], act_width)

    # ---- batch tile selection ----
    # >= 2 grid steps whenever batch > 8 (so "parallel" batch axis can shard
    # across the two v7x TensorCores); capped at tb_max for VMEM (v7x: 64 MiB).
    rows = max(8, _round_up(batch, 8))
    if batch <= 8:
        tb = rows
    else:
        tb = min(_round_up(tb_max, 8), _round_up(pl.cdiv(rows, 2), 8))
    grid = (pl.cdiv(batch, tb),)

    kernel = functools.partial(
        _feature_transformer_kernel,
        split=split, use_roll=use_roll, out_channels=out_channels)

    def weight_spec(w):
        return pl.BlockSpec(w.shape, lambda i: (0, 0))       # VMEM-resident weight

    out = pl.pallas_call(
        kernel,
        out_shape=jax.ShapeDtypeStruct((batch, out_channels), jnp.float32),
        grid_spec=pltpu.PrefetchScalarGridSpec(
            num_scalar_prefetch=0,
            grid=grid,
            in_specs=[
                pl.BlockSpec((tb, in_channels), lambda i: (i, 0)),   # x tile
                weight_spec(w0),
                weight_spec(w1),
                weight_spec(w2),
                weight_spec(w3),
            ],
            out_specs=pl.BlockSpec((tb, out_channels), lambda i: (i, 0)),
        ),
        compiler_params=pltpu.CompilerParams(
            dimension_semantics=("parallel",),
            vmem_limit_bytes=48 * 1024 * 1024,
        ),
    )(x, w0, w1, w2, w3)
    return out


def feature_transformer_ref(x, weights):
    """Pure-JAX f32 reference of the PyTorch forward (for correctness check)."""
    out_channels = weights[0].shape[1] // 2

    def glu_layer(h, w):
        z = h @ w
        return z[:, :out_channels] * jax.nn.sigmoid(z[:, out_channels:])

    h = x.astype(jnp.float32)
    h = glu_layer(h, weights[0])                           # shared, layer 0 (no residual)
    h = h * SQRT_HALF + glu_layer(h, weights[1])           # shared, layer 1
    h = h * SQRT_HALF + glu_layer(h, weights[2])           # dependent, layer 0
    h = h * SQRT_HALF + glu_layer(h, weights[3])           # dependent, layer 1
    return h


if __name__ == "__main__":
    in_channels = 16
    out_channels = 32

    key = jax.random.PRNGKey(0)
    kx, kx2, k0, k1, k2, k3 = jax.random.split(key, 6)

    # Deterministic Linear-style init: U(-1/sqrt(fan_in), 1/sqrt(fan_in)),
    # stored pre-transposed as [in, 2*out].
    def init_linear(k, fan_in, fan_out2):
        bound = 1.0 / math.sqrt(fan_in)
        return jax.random.uniform(k, (fan_in, fan_out2), jnp.float32,
                                  minval=-bound, maxval=bound)

    weights = [
        init_linear(k0, in_channels, 2 * out_channels),   # shared layer 0
        init_linear(k1, out_channels, 2 * out_channels),  # shared layer 1
        init_linear(k2, out_channels, 2 * out_channels),  # dependent layer 0
        init_linear(k3, out_channels, 2 * out_channels),  # dependent layer 1
    ]

    # bf16 matmul operands (f32 accumulate) -> loose tolerance.
    TOL = dict(atol=3e-2, rtol=3e-2)

    # Small case: single grid step.
    x_small = jax.random.normal(kx, (8, in_channels), dtype=jnp.float32)
    out_small = jax.block_until_ready(feature_transformer(x_small, weights))
    ref_small = feature_transformer_ref(x_small, weights)
    assert out_small.shape == (8, out_channels)
    assert jnp.allclose(out_small, ref_small, **TOL)

    # Ragged multi-step case: exercises the pipelined grid + masked final block
    # on both the input read and the true-width output store.
    x_big = jax.random.normal(kx2, (530, in_channels), dtype=jnp.float32)
    out_big = jax.block_until_ready(feature_transformer(x_big, weights))
    ref_big = feature_transformer_ref(x_big, weights)
    assert out_big.shape == (530, out_channels)
    assert jnp.allclose(out_big, ref_big, **TOL)

    print("KERNEL_OK")
</pallas_src>

<mosaic_0001>
module attributes {stable_mosaic.version = 11 : i64} {
  func.func @_feature_transformer_kernel(%arg0: i32, %arg1: memref<8x16xf32, #tpu.memory_space<vmem>>, %arg2: memref<16x128xbf16, #tpu.memory_space<vmem>>, %arg3: memref<128x128xbf16, #tpu.memory_space<vmem>>, %arg4: memref<128x128xbf16, #tpu.memory_space<vmem>>, %arg5: memref<128x128xbf16, #tpu.memory_space<vmem>>, %arg6: memref<8x32xf32, #tpu.memory_space<vmem>>) attributes {dimension_semantics = [#tpu.dimension_semantics<parallel>], iteration_bounds = array<i64: 1>, scalar_prefetch = 0 : i64, scratch_operands = 0 : i64, tpu.core_type = #tpu.core_type<tc>, window_params = [{transform_indices = @transform_0, window_bounds = array<i64: 8, 16>}, {pipeline_mode = #tpu.pipeline_mode<synchronous>, transform_indices = @transform_1, window_bounds = array<i64: 16, 128>}, {pipeline_mode = #tpu.pipeline_mode<synchronous>, transform_indices = @transform_2, window_bounds = array<i64: 128, 128>}, {pipeline_mode = #tpu.pipeline_mode<synchronous>, transform_indices = @transform_3, window_bounds = array<i64: 128, 128>}, {pipeline_mode = #tpu.pipeline_mode<synchronous>, transform_indices = @transform_4, window_bounds = array<i64: 128, 128>}, {transform_indices = @transform_5, window_bounds = array<i64: 8, 32>}]} {
    %c0 = arith.constant 0 : index
    %c0_0 = arith.constant 0 : index
    %0 = vector.load %arg1[%c0, %c0_0] : memref<8x16xf32, #tpu.memory_space<vmem>>, vector<8x16xf32>
    %1 = arith.truncf %0 : vector<8x16xf32> to vector<8x16xbf16>
    %c0_1 = arith.constant 0 : index
    %c0_2 = arith.constant 0 : index
    %2 = vector.load %arg2[%c0_1, %c0_2] : memref<16x128xbf16, #tpu.memory_space<vmem>>, vector<16x128xbf16>
    %cst = arith.constant dense<0.000000e+00> : vector<8x128xf32>
    %3 = tpu.matmul %1, %2, %cst {dimension_numbers = #tpu.dot_dimension_numbers<[1], [0], [0], [1], [0, 0, 1, 1], [], []>} : vector<8x16xbf16>, vector<16x128xbf16>, vector<8x128xf32> -> vector<8x128xf32>
    %c64_i32 = arith.constant 64 : i32
    %4 = tpu.dynamic_rotate %3 by %c64_i32 dim 1 : vector<8x128xf32>, i32 -> vector<8x128xf32>
    %5 = arith.negf %4 : vector<8x128xf32>
    %6 = math.exp %5 : vector<8x128xf32>
    %cst_3 = arith.constant 1.000000e+00 : f32
    %7 = vector.broadcast %cst_3 : f32 to vector<8x128xf32>
    %8 = arith.addf %7, %6 : vector<8x128xf32>
    %9 = arith.divf %7, %8 : vector<8x128xf32>
    %10 = arith.mulf %3, %9 : vector<8x128xf32>
    %cst_4 = arith.constant 0.707106769 : f32
    %11 = vector.broadcast %cst_4 : f32 to vector<8x128xf32>
    %12 = arith.mulf %10, %11 : vector<8x128xf32>
    %13 = arith.truncf %10 : vector<8x128xf32> to vector<8x128xbf16>
    %c0_5 = arith.constant 0 : index
    %c0_6 = arith.constant 0 : index
    %14 = vector.load %arg3[%c0_5, %c0_6] : memref<128x128xbf16, #tpu.memory_space<vmem>>, vector<128x128xbf16>
    %cst_7 = arith.constant dense<0.000000e+00> : vector<8x128xf32>
    %15 = tpu.matmul %13, %14, %cst_7 {dimension_numbers = #tpu.dot_dimension_numbers<[1], [0], [0], [1], [0, 0, 1, 1], [], []>} : vector<8x128xbf16>, vector<128x128xbf16>, vector<8x128xf32> -> vector<8x128xf32>
    %c64_i32_8 = arith.constant 64 : i32
    %16 = tpu.dynamic_rotate %15 by %c64_i32_8 dim 1 : vector<8x128xf32>, i32 -> vector<8x128xf32>
    %17 = arith.negf %16 : vector<8x128xf32>
    %18 = math.exp %17 : vector<8x128xf32>
    %cst_9 = arith.constant 1.000000e+00 : f32
    %19 = vector.broadcast %cst_9 : f32 to vector<8x128xf32>
    %20 = arith.addf %19, %18 : vector<8x128xf32>
    %21 = arith.divf %19, %20 : vector<8x128xf32>
    %22 = arith.mulf %15, %21 : vector<8x128xf32>
    %23 = arith.addf %12, %22 : vector<8x128xf32>
    %cst_10 = arith.constant 0.707106769 : f32
    %24 = vector.broadcast %cst_10 : f32 to vector<8x128xf32>
    %25 = arith.mulf %23, %24 : vector<8x128xf32>
    %26 = arith.truncf %23 : vector<8x128xf32> to vector<8x128xbf16>
    %c0_11 = arith.constant 0 : index
    %c0_12 = arith.constant 0 : index
    %27 = vector.load %arg4[%c0_11, %c0_12] : memref<128x128xbf16, #tpu.memory_space<vmem>>, vector<128x128xbf16>
    %cst_13 = arith.constant dense<0.000000e+00> : vector<8x128xf32>
    %28 = tpu.matmul %26, %27, %cst_13 {dimension_numbers = #tpu.dot_dimension_numbers<[1], [0], [0], [1], [0, 0, 1, 1], [], []>} : vector<8x128xbf16>, vector<128x128xbf16>, vector<8x128xf32> -> vector<8x128xf32>
    %c64_i32_14 = arith.constant 64 : i32
    %29 = tpu.dynamic_rotate %28 by %c64_i32_14 dim 1 : vector<8x128xf32>, i32 -> vector<8x128xf32>
    %30 = arith.negf %29 : vector<8x128xf32>
    %31 = math.exp %30 : vector<8x128xf32>
    %cst_15 = arith.constant 1.000000e+00 : f32
    %32 = vector.broadcast %cst_15 : f32 to vector<8x128xf32>
    %33 = arith.addf %32, %31 : vector<8x128xf32>
    %34 = arith.divf %32, %33 : vector<8x128xf32>
    %35 = arith.mulf %28, %34 : vector<8x128xf32>
    %36 = arith.addf %25, %35 : vector<8x128xf32>
    %cst_16 = arith.constant 0.707106769 : f32
    %37 = vector.broadcast %cst_16 : f32 to vector<8x128xf32>
    %38 = arith.mulf %36, %37 : vector<8x128xf32>
    %39 = arith.truncf %36 : vector<8x128xf32> to vector<8x128xbf16>
    %c0_17 = arith.constant 0 : index
    %c0_18 = arith.constant 0 : index
    %40 = vector.load %arg5[%c0_17, %c0_18] : memref<128x128xbf16, #tpu.memory_space<vmem>>, vector<128x128xbf16>
    %cst_19 = arith.constant dense<0.000000e+00> : vector<8x128xf32>
    %41 = tpu.matmul %39, %40, %cst_19 {dimension_numbers = #tpu.dot_dimension_numbers<[1], [0], [0], [1], [0, 0, 1, 1], [], []>} : vector<8x128xbf16>, vector<128x128xbf16>, vector<8x128xf32> -> vector<8x128xf32>
    %c64_i32_20 = arith.constant 64 : i32
    %42 = tpu.dynamic_rotate %41 by %c64_i32_20 dim 1 : vector<8x128xf32>, i32 -> vector<8x128xf32>
    %43 = arith.negf %42 : vector<8x128xf32>
    %44 = math.exp %43 : vector<8x128xf32>
    %cst_21 = arith.constant 1.000000e+00 : f32
    %45 = vector.broadcast %cst_21 : f32 to vector<8x128xf32>
    %46 = arith.addf %45, %44 : vector<8x128xf32>
    %47 = arith.divf %45, %46 : vector<8x128xf32>
    %48 = arith.mulf %41, %47 : vector<8x128xf32>
    %49 = arith.addf %38, %48 : vector<8x128xf32>
    %50 = vector.extract_strided_slice %49 {offsets = [0, 0], sizes = [8, 32], strides = [1, 1]} : vector<8x128xf32> to vector<8x32xf32>
    %c0_22 = arith.constant 0 : index
    %c0_23 = arith.constant 0 : index
    %51 = vector.load %arg6[%c0_22, %c0_23] : memref<8x32xf32, #tpu.memory_space<vmem>>, vector<8x32xf32>
    tpu.vector_store %arg6[%c0_22, %c0_23], %50 {strides = array<i32>} : memref<8x32xf32, #tpu.memory_space<vmem>>, vector<8x32xf32>,
    return
  }
  func.func @transform_0(%arg0: i32) -> (i32, i32) {
    %c0_i32 = arith.constant 0 : i32
    %c0_i32_0 = arith.constant 0 : i32
    return %arg0, %c0_i32 : i32, i32
  }
  func.func @transform_1(%arg0: i32) -> (i32, i32) {
    %c0_i32 = arith.constant 0 : i32
    %c0_i32_0 = arith.constant 0 : i32
    %c0_i32_1 = arith.constant 0 : i32
    return %c0_i32, %c0_i32_0 : i32, i32
  }
  func.func @transform_2(%arg0: i32) -> (i32, i32) {
    %c0_i32 = arith.constant 0 : i32
    %c0_i32_0 = arith.constant 0 : i32
    %c0_i32_1 = arith.constant 0 : i32
    return %c0_i32, %c0_i32_0 : i32, i32
  }
  func.func @transform_3(%arg0: i32) -> (i32, i32) {
    %c0_i32 = arith.constant 0 : i32
    %c0_i32_0 = arith.constant 0 : i32
    %c0_i32_1 = arith.constant 0 : i32
    return %c0_i32, %c0_i32_0 : i32, i32
  }
  func.func @transform_4(%arg0: i32) -> (i32, i32) {
    %c0_i32 = arith.constant 0 : i32
    %c0_i32_0 = arith.constant 0 : i32
    %c0_i32_1 = arith.constant 0 : i32
    return %c0_i32, %c0_i32_0 : i32, i32
  }
  func.func @transform_5(%arg0: i32) -> (i32, i32) {
    %c0_i32 = arith.constant 0 : i32
    %c0_i32_0 = arith.constant 0 : i32
    return %arg0, %c0_i32 : i32, i32
  }
}

</mosaic_0001>

<llo_original>
// kernel: tpu_custom_call.1
$region0: #{tpu_custom_call.1}
  #allocation0 [shape = 'u32[]', space=smem, size = 0x4, offset = 0x4, fixed_abs, tag = 'smem constant byte address 0x4 - core index']
  #allocation1 [shape = 'u32[144,128]{1,0:T(1,128)}', space=vmem, size = 0x12000, scoped, tag = 'internal scratch']
  %s0 = inlined_call_operand.hbm [shape: f32[8,16], index: 0, kind: input, shape index: {}]
  %s1 = inlined_call_operand.hbm [shape: bf16[16,128], index: 1, kind: input, shape index: {}]
  %s2 = inlined_call_operand.hbm [shape: bf16[128,128], index: 2, kind: input, shape index: {}]
  %s3 = inlined_call_operand.hbm [shape: bf16[128,128], index: 3, kind: input, shape index: {}]
  %s4 = inlined_call_operand.hbm [shape: bf16[128,128], index: 4, kind: input, shape index: {}]
  %s5 = inlined_call_operand.hbm [shape: f32[8,32], index: 5, kind: output, shape index: {}]
  %s6 = sld [smem:[#allocation0]]
  $region50: #{tpu_custom_call.1} parent=0
    _
  %s8 = ssub.s32 1, %s6
  %s9 = scalar_select 0, %s8, %s6
  $region1: #{tpu_custom_call.1} parent=0
    #allocation2 [shape = 'u8[4096]{0}', space=vmem, size = 0x1000, scoped, tag = 'input window, operand 0, single buffered']
    #allocation3 [shape = 's32[1]{0}', space=sflag, size = 0x4, scoped, tag = 'scoped memory for tpu_custom_call.1']
    #allocation4 [shape = 's32[1]{0}', space=sflag, size = 0x4, scoped, tag = 'scoped memory for tpu_custom_call.1']
    #allocation5 [shape = 'u8[4096]{0}', space=vmem, size = 0x1000, scoped, tag = 'input window, operand 1, single buffered']
    #allocation6 [shape = 's32[1]{0}', space=sflag, size = 0x4, scoped, tag = 'scoped memory for tpu_custom_call.1']
    #allocation7 [shape = 'u8[32768]{0}', space=vmem, size = 0x8000, scoped, tag = 'input window, operand 2, single buffered']
    #allocation8 [shape = 'u8[32768]{0}', space=vmem, size = 0x8000, scoped, tag = 'input window, operand 3, single buffered']
    #allocation9 [shape = 's32[1]{0}', space=sflag, size = 0x4, scoped, tag = 'scoped memory for tpu_custom_call.1']
    #allocation10 [shape = 'u8[32768]{0}', space=vmem, size = 0x8000, scoped, tag = 'input window, operand 4, single buffered']
    #allocation11 [shape = 'u8[4096]{0}', space=vmem, size = 0x1000, scoped, tag = 'output window, operand 0, single buffered']
    %10 = vsyncpa [#allocation3], 0
    %11 = vsyncpa [#allocation6], 0
    %12 = vsyncpa [#allocation9], 0
    %13 = vsyncpa [#allocation4], 0
    // Predicated region
    $region2: #{tpu_custom_call.1} parent=1 // pred_check
      _
    $region3: #{tpu_custom_call.1} parent=1 // pred_check_branch
      %15 = sbr.rel (0) target = $region5
    $region4: #{tpu_custom_call.1} parent=1 // pred_region
      %s17 = ssub.s32 128, 128
      %18 = vsyncadd [#allocation3], %s17
      %s20 = sshll.u32 [#allocation2], 4
      %s21 = int_to_ptr.vmem [resolvable:$true] %s20
      %23 = dma.hbm_to_vmem [thread:$0]  %s0, 128, %s21, [#allocation3]
    $region5: #{tpu_custom_call.1} parent=1 // pred_fallthru
      _
    // Predicated region
    $region6: #{tpu_custom_call.1} parent=1 // pred_check
      _
    $region7: #{tpu_custom_call.1} parent=1 // pred_check_branch
      %25 = sbr.rel (0) target = $region9
    $region8: #{tpu_custom_call.1} parent=1 // pred_region
      %s27 = ssub.s32 128, 128
      %28 = vsyncadd [#allocation6], %s27
      %s29 = sshll.u32 [#allocation5], 4
      %s30 = int_to_ptr.vmem [resolvable:$true] %s29
      %35 = dma.hbm_to_vmem [thread:$0]  %s1, 128, %s30, [#allocation6], 64, 64, 4
    $region9: #{tpu_custom_call.1} parent=1 // pred_fallthru
      _
    // Predicated region
    $region10: #{tpu_custom_call.1} parent=1 // pred_check
      _
    $region11: #{tpu_custom_call.1} parent=1 // pred_check_branch
      %37 = sbr.rel (0) target = $region13
    $region12: #{tpu_custom_call.1} parent=1 // pred_region
      %s39 = ssub.s32 1024, 1024
      %40 = vsyncadd [#allocation6], %s39
      %s41 = sshll.u32 [#allocation7], 4
      %s42 = int_to_ptr.vmem [resolvable:$true] %s41
      %47 = dma.hbm_to_vmem [thread:$0]  %s2, 1024, %s42, [#allocation6], 64, 64, 4
    $region13: #{tpu_custom_call.1} parent=1 // pred_fallthru
      _
    // Predicated region
    $region14: #{tpu_custom_call.1} parent=1 // pred_check
      _
    $region15: #{tpu_custom_call.1} parent=1 // pred_check_branch
      %49 = sbr.rel (0) target = $region17
    $region16: #{tpu_custom_call.1} parent=1 // pred_region
      %s51 = ssub.s32 1024, 1024
      %52 = vsyncadd [#allocation9], %s51
      %s53 = sshll.u32 [#allocation8], 4
      %s54 = int_to_ptr.vmem [resolvable:$true] %s53
      %59 = dma.hbm_to_vmem [thread:$0]  %s3, 1024, %s54, [#allocation9], 64, 64, 4
    $region17: #{tpu_custom_call.1} parent=1 // pred_fallthru
      _
    // Predicated region
    $region18: #{tpu_custom_call.1} parent=1 // pred_check
      _
    $region19: #{tpu_custom_call.1} parent=1 // pred_check_branch
      %61 = sbr.rel (0) target = $region21
    $region20: #{tpu_custom_call.1} parent=1 // pred_region
      %s63 = ssub.s32 1024, 1024
      %64 = vsyncadd [#allocation9], %s63
      %s65 = sshll.u32 [#allocation10], 4
      %s66 = int_to_ptr.vmem [resolvable:$true] %s65
      %71 = dma.hbm_to_vmem [thread:$0]  %s4, 1024, %s66, [#allocation9], 64, 64, 4
    $region21: #{tpu_custom_call.1} parent=1 // pred_fallthru
      _
    // Predicated region
    $region22: #{tpu_custom_call.1} parent=1 // pred_check
      _
    $region23: #{tpu_custom_call.1} parent=1 // pred_check_branch
      %73 = sbr.rel (0) target = $region25
    $region24: #{tpu_custom_call.1} parent=1 // pred_region
      %74 = dma.done [#allocation3], 128
    $region25: #{tpu_custom_call.1} parent=1 // pred_fallthru
      _
    // Predicated region
    $region26: #{tpu_custom_call.1} parent=1 // pred_check
      _
    $region27: #{tpu_custom_call.1} parent=1 // pred_check_branch
      %76 = sbr.rel (0) target = $region29
    $region28: #{tpu_custom_call.1} parent=1 // pred_region
      %77 = dma.done [#allocation6], 128
    $region29: #{tpu_custom_call.1} parent=1 // pred_fallthru
      _
    // Predicated region
    $region30: #{tpu_custom_call.1} parent=1 // pred_check
      _
    $region31: #{tpu_custom_call.1} parent=1 // pred_check_branch
      %79 = sbr.rel (0) target = $region33
    $region32: #{tpu_custom_call.1} parent=1 // pred_region
      %80 = dma.done [#allocation6], 1024
    $region33: #{tpu_custom_call.1} parent=1 // pred_fallthru
      _
    // Predicated region
    $region34: #{tpu_custom_call.1} parent=1 // pred_check
      _
    $region35: #{tpu_custom_call.1} parent=1 // pred_check_branch
      %82 = sbr.rel (0) target = $region37
    $region36: #{tpu_custom_call.1} parent=1 // pred_region
      %83 = dma.done [#allocation9], 1024
    $region37: #{tpu_custom_call.1} parent=1 // pred_fallthru
      _
    // Predicated region
    $region38: #{tpu_custom_call.1} parent=1 // pred_check
      _
    $region39: #{tpu_custom_call.1} parent=1 // pred_check_branch
      %85 = sbr.rel (0) target = $region41
    $region40: #{tpu_custom_call.1} parent=1 // pred_region
      %86 = dma.done [#allocation9], 1024
    $region41: #{tpu_custom_call.1} parent=1 // pred_fallthru
      _
    %v88 = vld [vmem:[#allocation2] sm:$0xff]
    %v89 = vpack.c.bf16 %v88, %v88
    %v90 = vld [vmem:[#allocation5] sm:$0xf]
    %v91 = vld [vmem:[#allocation5 + $0x4] sm:$0xf]
    %v94 = vunpack.c.l.b16 %v90
    %v95 = vunpack.c.l.b16 %v91
    %v96 = vpack.c.b16 %v95, %v94
    %vm98 = vcmask 130048
    %v100 = vsel %vm98, %v89, 0
    %102 = vmatprep.subr.bf16.mxu0 0
    %103 = vmatpush1.bf16.msra.mxu0 %v96
    %104 = vmatprep.subr.bf16.mxu0 0
    %105 = vmatpush1.bf16.msra.mxu0 0
    %106 = vmatprep.subr.bf16.mxu0 0
    %107 = vmatpush1.bf16.msra.mxu0 0
    %108 = vmatprep.subr.bf16.mxu0 0
    %109 = vmatpush1.bf16.msra.mxu0 0
    %110 = vmatprep.subr.bf16.mxu0 0
    %111 = vmatpush1.bf16.msra.mxu0 0
    %112 = vmatprep.subr.bf16.mxu0 0
    %113 = vmatpush1.bf16.msra.mxu0 0
    %114 = vmatprep.subr.bf16.mxu0 0
    %115 = vmatpush1.bf16.msra.mxu0 0
    %116 = vmatprep.subr.bf16.mxu0 0
    %117 = vmatpush1.bf16.msra.mxu0 0
    %118 = vmatprep.subr.bf16.mxu0 0
    %119 = vmatpush1.bf16.msra.mxu0 0
    %120 = vmatprep.subr.bf16.mxu0 0
    %121 = vmatpush1.bf16.msra.mxu0 0
    %122 = vmatprep.subr.bf16.mxu0 0
    %123 = vmatpush1.bf16.msra.mxu0 0
    %124 = vmatprep.subr.bf16.mxu0 0
    %125 = vmatpush1.bf16.msra.mxu0 0
    %126 = vmatprep.subr.bf16.mxu0 0
    %127 = vmatpush1.bf16.msra.mxu0 0
    %128 = vmatprep.subr.bf16.mxu0 0
    %129 = vmatpush1.bf16.msra.mxu0 0
    %130 = vmatprep.subr.bf16.mxu0 0
    %131 = vmatpush1.bf16.msra.mxu0 0
    %132 = vmatprep.subr.bf16.mxu0 0
    %133 = vmatpush1.bf16.msra.mxu0 0
    %134 = vmatprep.mubr.bf16.mxu0 0
    %135 = vmatmul.mubr.bf16.gmra.mrb[0].mxu0 %v100
    %v136 = vpop.f32.mrb[0].mxu0
    %v137 = vadd.f32 0.0, %v136
    %v138 = vpop.f32.mrb[0].mxu0
    %v139 = vpop.f32.mrb[0].mxu0
    %v140 = vpop.f32.mrb[0].mxu0
    %141 = vdwg.mxu0
    %142 = vrot.lane.b32.xlu0 %v137, 64
    %v143 = vpop.permute.xlu0 %142
    %v144 = vxor.u32 %v143, 2147483648
    %v145 = vmul.f32 %v144, 1.442695
    %v146 = vpow.pop %v145
    %v147 = vadd.f32 %v146, 1.0
    %v148 = vrcp.pop %v147
    %v149 = vmul.f32 1.0, %v148
    %v150 = vmul.f32 %v137, %v149
    %v151 = vmul.f32 %v150, 0.70710677
    %v152 = vpack.c.bf16 %v150, %v150
    %v153 = vld [vmem:[#allocation7] sm:$0xf]
    %v154 = vld [vmem:[#allocation7 + $0x4] sm:$0xf]
    %v155 = vld [vmem:[#allocation7 + $0x8] sm:$0xf]
    %v156 = vld [vmem:[#allocation7 + $0xc] sm:$0xf]
    %v157 = vld [vmem:[#allocation7 + $0x10] sm:$0xf]
    %v158 = vld [vmem:[#allocation7 + $0x14] sm:$0xf]
    %v159 = vld [vmem:[#allocation7 + $0x18] sm:$0xf]
    %v160 = vld [vmem:[#allocation7 + $0x1c] sm:$0xf]
    %v161 = vld [vmem:[#allocation7 + $0x20] sm:$0xf]
    %v162 = vld [vmem:[#allocation7 + $0x24] sm:$0xf]
    %v163 = vld [vmem:[#allocation7 + $0x28] sm:$0xf]
    %v164 = vld [vmem:[#allocation7 + $0x2c] sm:$0xf]
    %v165 = vld [vmem:[#allocation7 + $0x30] sm:$0xf]
    %v166 = vld [vmem:[#allocation7 + $0x34] sm:$0xf]
    %v167 = vld [vmem:[#allocation7 + $0x38] sm:$0xf]
    %v168 = vld [vmem:[#allocation7 + $0x3c] sm:$0xf]
    %v185 = vunpack.c.l.b16 %v153
    %v186 = vunpack.c.l.b16 %v154
    %v187 = vunpack.c.l.b16 %v155
    %v188 = vunpack.c.l.b16 %v156
    %v189 = vunpack.c.l.b16 %v157
    %v190 = vunpack.c.l.b16 %v158
    %v191 = vunpack.c.l.b16 %v159
    %v192 = vunpack.c.l.b16 %v160
    %v193 = vunpack.c.l.b16 %v161
    %v194 = vunpack.c.l.b16 %v162
    %v195 = vunpack.c.l.b16 %v163
    %v196 = vunpack.c.l.b16 %v164
    %v197 = vunpack.c.l.b16 %v165
    %v198 = vunpack.c.l.b16 %v166
    %v199 = vunpack.c.l.b16 %v167
    %v200 = vunpack.c.l.b16 %v168
    %v201 = vpack.c.b16 %v186, %v185
    %v202 = vpack.c.b16 %v188, %v187
    %v203 = vpack.c.b16 %v190, %v189
    %v204 = vpack.c.b16 %v192, %v191
    %v205 = vpack.c.b16 %v194, %v193
    %v206 = vpack.c.b16 %v196, %v195
    %v207 = vpack.c.b16 %v198, %v197
    %v208 = vpack.c.b16 %v200, %v199
    %217 = vmatprep.subr.bf16.mxu0 0
    %218 = vmatpush1.bf16.msra.mxu0 %v201
    %219 = vmatprep.subr.bf16.mxu0 0
    %220 = vmatpush1.bf16.msra.mxu0 %v202
    %221 = vmatprep.subr.bf16.mxu0 0
    %222 = vmatpush1.bf16.msra.mxu0 %v203
    %223 = vmatprep.subr.bf16.mxu0 0
    %224 = vmatpush1.bf16.msra.mxu0 %v204
    %225 = vmatprep.subr.bf16.mxu0 0
    %226 = vmatpush1.bf16.msra.mxu0 %v205
    %227 = vmatprep.subr.bf16.mxu0 0
    %228 = vmatpush1.bf16.msra.mxu0 %v206
    %229 = vmatprep.subr.bf16.mxu0 0
    %230 = vmatpush1.bf16.msra.mxu0 %v207
    %231 = vmatprep.subr.bf16.mxu0 0
    %232 = vmatpush1.bf16.msra.mxu0 %v208
    %233 = vmatprep.subr.bf16.mxu0 0
    %234 = vmatpush1.bf16.msra.mxu0 0
    %235 = vmatprep.subr.bf16.mxu0 0
    %236 = vmatpush1.bf16.msra.mxu0 0
    %237 = vmatprep.subr.bf16.mxu0 0
    %238 = vmatpush1.bf16.msra.mxu0 0
    %239 = vmatprep.subr.bf16.mxu0 0
    %240 = vmatpush1.bf16.msra.mxu0 0
    %241 = vmatprep.subr.bf16.mxu0 0
    %242 = vmatpush1.bf16.msra.mxu0 0
    %243 = vmatprep.subr.bf16.mxu0 0
    %244 = vmatpush1.bf16.msra.mxu0 0
    %245 = vmatprep.subr.bf16.mxu0 0
    %246 = vmatpush1.bf16.msra.mxu0 0
    %247 = vmatprep.subr.bf16.mxu0 0
    %248 = vmatpush1.bf16.msra.mxu0 0
    %249 = vmatprep.mubr.bf16.mxu0 0
    %250 = vmatmul.mubr.bf16.gmra.mrb[0].mxu0 %v152
    %v251 = vpop.f32.mrb[0].mxu0
    %v252 = vadd.f32 0.0, %v251
    %v253 = vpop.f32.mrb[0].mxu0
    %v254 = vpop.f32.mrb[0].mxu0
    %v255 = vpop.f32.mrb[0].mxu0
    %256 = vdwg.mxu0
    %257 = vrot.lane.b32.xlu0 %v252, 64
    %v258 = vpop.permute.xlu0 %257
    %v259 = vxor.u32 %v258, 2147483648
    %v260 = vmul.f32 %v259, 1.442695
    %v261 = vpow.pop %v260
    %v262 = vadd.f32 %v261, 1.0
    %v263 = vrcp.pop %v262
    %v264 = vmul.f32 1.0, %v263
    %v265 = vmul.f32 %v252, %v264
    %v266 = vadd.f32 %v151, %v265
    %v267 = vmul.f32 %v266, 0.70710677
    %v268 = vpack.c.bf16 %v266, %v266
    %v269 = vld [vmem:[#allocation8] sm:$0xf]
    %v270 = vld [vmem:[#allocation8 + $0x4] sm:$0xf]
    %v271 = vld [vmem:[#allocation8 + $0x8] sm:$0xf]
    %v272 = vld [vmem:[#allocation8 + $0xc] sm:$0xf]
    %v273 = vld [vmem:[#allocation8 + $0x10] sm:$0xf]
    %v274 = vld [vmem:[#allocation8 + $0x14] sm:$0xf]
    %v275 = vld [vmem:[#allocation8 + $0x18] sm:$0xf]
    %v276 = vld [vmem:[#allocation8 + $0x1c] sm:$0xf]
    %v277 = vld [vmem:[#allocation8 + $0x20] sm:$0xf]
    %v278 = vld [vmem:[#allocation8 + $0x24] sm:$0xf]
    %v279 = vld [vmem:[#allocation8 + $0x28] sm:$0xf]
    %v280 = vld [vmem:[#allocation8 + $0x2c] sm:$0xf]
    %v281 = vld [vmem:[#allocation8 + $0x30] sm:$0xf]
    %v282 = vld [vmem:[#allocation8 + $0x34] sm:$0xf]
    %v283 = vld [vmem:[#allocation8 + $0x38] sm:$0xf]
    %v284 = vld [vmem:[#allocation8 + $0x3c] sm:$0xf]
    %v301 = vunpack.c.l.b16 %v269
    %v302 = vunpack.c.l.b16 %v270
    %v303 = vunpack.c.l.b16 %v271
    %v304 = vunpack.c.l.b16 %v272
    %v305 = vunpack.c.l.b16 %v273
    %v306 = vunpack.c.l.b16 %v274
    %v307 = vunpack.c.l.b16 %v275
    %v308 = vunpack.c.l.b16 %v276
    %v309 = vunpack.c.l.b16 %v277
    %v310 = vunpack.c.l.b16 %v278
    %v311 = vunpack.c.l.b16 %v279
    %v312 = vunpack.c.l.b16 %v280
    %v313 = vunpack.c.l.b16 %v281
    %v314 = vunpack.c.l.b16 %v282
    %v315 = vunpack.c.l.b16 %v283
    %v316 = vunpack.c.l.b16 %v284
    %v317 = vpack.c.b16 %v302, %v301
    %v318 = vpack.c.b16 %v304, %v303
    %v319 = vpack.c.b16 %v306, %v305
    %v320 = vpack.c.b16 %v308, %v307
    %v321 = vpack.c.b16 %v310, %v309
    %v322 = vpack.c.b16 %v312, %v311
    %v323 = vpack.c.b16 %v314, %v313
    %v324 = vpack.c.b16 %v316, %v315
    %333 = vmatprep.subr.bf16.mxu0 0
    %334 = vmatpush1.bf16.msra.mxu0 %v317
    %335 = vmatprep.subr.bf16.mxu0 0
    %336 = vmatpush1.bf16.msra.mxu0 %v318
    %337 = vmatprep.subr.bf16.mxu0 0
    %338 = vmatpush1.bf16.msra.mxu0 %v319
    %339 = vmatprep.subr.bf16.mxu0 0
    %340 = vmatpush1.bf16.msra.mxu0 %v320
    %341 = vmatprep.subr.bf16.mxu0 0
    %342 = vmatpush1.bf16.msra.mxu0 %v321
    %343 = vmatprep.subr.bf16.mxu0 0
    %344 = vmatpush1.bf16.msra.mxu0 %v322
    %345 = vmatprep.subr.bf16.mxu0 0
    %346 = vmatpush1.bf16.msra.mxu0 %v323
    %347 = vmatprep.subr.bf16.mxu0 0
    %348 = vmatpush1.bf16.msra.mxu0 %v324
    %349 = vmatprep.subr.bf16.mxu0 0
    %350 = vmatpush1.bf16.msra.mxu0 0
    %351 = vmatprep.subr.bf16.mxu0 0
    %352 = vmatpush1.bf16.msra.mxu0 0
    %353 = vmatprep.subr.bf16.mxu0 0
    %354 = vmatpush1.bf16.msra.mxu0 0
    %355 = vmatprep.subr.bf16.mxu0 0
    %356 = vmatpush1.bf16.msra.mxu0 0
    %357 = vmatprep.subr.bf16.mxu0 0
    %358 = vmatpush1.bf16.msra.mxu0 0
    %359 = vmatprep.subr.bf16.mxu0 0
    %360 = vmatpush1.bf16.msra.mxu0 0
    %361 = vmatprep.subr.bf16.mxu0 0
    %362 = vmatpush1.bf16.msra.mxu0 0
    %363 = vmatprep.subr.bf16.mxu0 0
    %364 = vmatpush1.bf16.msra.mxu0 0
    %365 = vmatprep.mubr.bf16.mxu0 0
    %366 = vmatmul.mubr.bf16.gmra.mrb[0].mxu0 %v268
    %v367 = vpop.f32.mrb[0].mxu0
    %v368 = vadd.f32 0.0, %v367
    %v369 = vpop.f32.mrb[0].mxu0
    %v370 = vpop.f32.mrb[0].mxu0
    %v371 = vpop.f32.mrb[0].mxu0
    %372 = vdwg.mxu0
    %373 = vrot.lane.b32.xlu0 %v368, 64
    %v374 = vpop.permute.xlu0 %373
    %v375 = vxor.u32 %v374, 2147483648
    %v376 = vmul.f32 %v375, 1.442695
    %v377 = vpow.pop %v376
    %v378 = vadd.f32 %v377, 1.0
    %v379 = vrcp.pop %v378
    %v380 = vmul.f32 1.0, %v379
    %v381 = vmul.f32 %v368, %v380
    %v382 = vadd.f32 %v267, %v381
    %v383 = vmul.f32 %v382, 0.70710677
    %v384 = vpack.c.bf16 %v382, %v382
    %v385 = vld [vmem:[#allocation10] sm:$0xf]
    %v386 = vld [vmem:[#allocation10 + $0x4] sm:$0xf]
    %v387 = vld [vmem:[#allocation10 + $0x8] sm:$0xf]
    %v388 = vld [vmem:[#allocation10 + $0xc] sm:$0xf]
    %v389 = vld [vmem:[#allocation10 + $0x10] sm:$0xf]
    %v390 = vld [vmem:[#allocation10 + $0x14] sm:$0xf]
    %v391 = vld [vmem:[#allocation10 + $0x18] sm:$0xf]
    %v392 = vld [vmem:[#allocation10 + $0x1c] sm:$0xf]
    %v393 = vld [vmem:[#allocation10 + $0x20] sm:$0xf]
    %v394 = vld [vmem:[#allocation10 + $0x24] sm:$0xf]
    %v395 = vld [vmem:[#allocation10 + $0x28] sm:$0xf]
    %v396 = vld [vmem:[#allocation10 + $0x2c] sm:$0xf]
    %v397 = vld [vmem:[#allocation10 + $0x30] sm:$0xf]
    %v398 = vld [vmem:[#allocation10 + $0x34] sm:$0xf]
    %v399 = vld [vmem:[#allocation10 + $0x38] sm:$0xf]
    %v400 = vld [vmem:[#allocation10 + $0x3c] sm:$0xf]
    %v417 = vunpack.c.l.b16 %v385
    %v418 = vunpack.c.l.b16 %v386
    %v419 = vunpack.c.l.b16 %v387
    %v420 = vunpack.c.l.b16 %v388
    %v421 = vunpack.c.l.b16 %v389
    %v422 = vunpack.c.l.b16 %v390
    %v423 = vunpack.c.l.b16 %v391
    %v424 = vunpack.c.l.b16 %v392
    %v425 = vunpack.c.l.b16 %v393
    %v426 = vunpack.c.l.b16 %v394
    %v427 = vunpack.c.l.b16 %v395
    %v428 = vunpack.c.l.b16 %v396
    %v429 = vunpack.c.l.b16 %v397
    %v430 = vunpack.c.l.b16 %v398
    %v431 = vunpack.c.l.b16 %v399
    %v432 = vunpack.c.l.b16 %v400
    %v433 = vpack.c.b16 %v418, %v417
    %v434 = vpack.c.b16 %v420, %v419
    %v435 = vpack.c.b16 %v422, %v421
    %v436 = vpack.c.b16 %v424, %v423
    %v437 = vpack.c.b16 %v426, %v425
    %v438 = vpack.c.b16 %v428, %v427
    %v439 = vpack.c.b16 %v430, %v429
    %v440 = vpack.c.b16 %v432, %v431
    %449 = vmatprep.subr.bf16.mxu0 0
    %450 = vmatpush1.bf16.msra.mxu0 %v433
    %451 = vmatprep.subr.bf16.mxu0 0
    %452 = vmatpush1.bf16.msra.mxu0 %v434
    %453 = vmatprep.subr.bf16.mxu0 0
    %454 = vmatpush1.bf16.msra.mxu0 %v435
    %455 = vmatprep.subr.bf16.mxu0 0
    %456 = vmatpush1.bf16.msra.mxu0 %v436
    %457 = vmatprep.subr.bf16.mxu0 0
    %458 = vmatpush1.bf16.msra.mxu0 %v437
    %459 = vmatprep.subr.bf16.mxu0 0
    %460 = vmatpush1.bf16.msra.mxu0 %v438
    %461 = vmatprep.subr.bf16.mxu0 0
    %462 = vmatpush1.bf16.msra.mxu0 %v439
    %463 = vmatprep.subr.bf16.mxu0 0
    %464 = vmatpush1.bf16.msra.mxu0 %v440
    %465 = vmatprep.subr.bf16.mxu0 0
    %466 = vmatpush1.bf16.msra.mxu0 0
    %467 = vmatprep.subr.bf16.mxu0 0
    %468 = vmatpush1.bf16.msra.mxu0 0
    %469 = vmatprep.subr.bf16.mxu0 0
    %470 = vmatpush1.bf16.msra.mxu0 0
    %471 = vmatprep.subr.bf16.mxu0 0
    %472 = vmatpush1.bf16.msra.mxu0 0
    %473 = vmatprep.subr.bf16.mxu0 0
    %474 = vmatpush1.bf16.msra.mxu0 0
    %475 = vmatprep.subr.bf16.mxu0 0
    %476 = vmatpush1.bf16.msra.mxu0 0
    %477 = vmatprep.subr.bf16.mxu0 0
    %478 = vmatpush1.bf16.msra.mxu0 0
    %479 = vmatprep.subr.bf16.mxu0 0
    %480 = vmatpush1.bf16.msra.mxu0 0
    %481 = vmatprep.mubr.bf16.mxu0 0
    %482 = vmatmul.mubr.bf16.gmra.mrb[0].mxu0 %v384
    %v483 = vpop.f32.mrb[0].mxu0
    %v484 = vadd.f32 0.0, %v483
    %v485 = vpop.f32.mrb[0].mxu0
    %v486 = vpop.f32.mrb[0].mxu0
    %v487 = vpop.f32.mrb[0].mxu0
    %488 = vdwg.mxu0
    %489 = vrot.lane.b32.xlu0 %v484, 64
    %v490 = vpop.permute.xlu0 %489
    %v491 = vxor.u32 %v490, 2147483648
    %v492 = vmul.f32 %v491, 1.442695
    %v493 = vpow.pop %v492
    %v494 = vadd.f32 %v493, 1.0
    %v495 = vrcp.pop %v494
    %v496 = vmul.f32 1.0, %v495
    %v497 = vmul.f32 %v484, %v496
    %v498 = vadd.f32 %v383, %v497
    %vm499 = vcmask 261120
    %500 = vst.msk [vmem:[#allocation11] sm:$0xff] %vm499, %v498
    // Predicated region
    $region42: #{tpu_custom_call.1} parent=1 // pred_check
      _
    $region43: #{tpu_custom_call.1} parent=1 // pred_check_branch
      %502 = sbr.rel (0) target = $region45
    $region44: #{tpu_custom_call.1} parent=1 // pred_region
      %s504 = ssub.s32 128, 128
      %505 = vsyncadd [#allocation4], %s504
      %s507 = sshll.u32 [#allocation11], 4
      %s508 = int_to_ptr.vmem [resolvable:$true] %s507
      %510 = dma.vmem_to_hbm [thread:$0]  %s508, 128, %s5, [#allocation4]
    $region45: #{tpu_custom_call.1} parent=1 // pred_fallthru
      _
    // Predicated region
    $region46: #{tpu_custom_call.1} parent=1 // pred_check
      _
    $region47: #{tpu_custom_call.1} parent=1 // pred_check_branch
      %512 = sbr.rel (0) target = $region49
    $region48: #{tpu_custom_call.1} parent=1 // pred_region
      %513 = dma.done [#allocation4], 128
    $region49: #{tpu_custom_call.1} parent=1 // pred_fallthru
      _
    %514 = vsyncpa [#allocation3], 1
    %515 = vsyncpa [#allocation6], 1
    %516 = vsyncpa [#allocation9], 1
    %517 = vsyncpa [#allocation4], 1

</llo_original>
